<compile_context>
chip_gen: v7x
topology: tpu7x:2x2x1
jax: 0.10.0
libtpu: 0.0.40
codegen_flags: <defaults>
</compile_context>

<pallas_src>
import jax
import jax.numpy as jnp
import numpy as np
from jax.experimental import pallas as pl
from jax.experimental.pallas import tpu as pltpu


def _vq_kernel(x_ref, e_ref, et_ref, esq_ref, q_ref, idx_ref, sse_ref):
    """Quantizes one (D, TILE_M) tile of tokens for one batch element.

    x_ref  : (D, T)   tokens (channels on sublanes, tokens on lanes)
    e_ref  : (K, D)   codebook (VMEM-resident across grid steps)
    et_ref : (D, K)   codebook transposed (precomputed in wrapper)
    esq_ref: (K, 1)   per-entry squared norms (precomputed in wrapper)
    q_ref  : (D, T)   quantized tokens
    idx_ref: (1, T)   nearest-codebook index
    sse_ref: (1, T)   per-token squared error
    """
    x = x_ref[...]                                       # (D, T) f32
    e = e_ref[...]                                       # (K, D) f32
    n_codes = e.shape[0]

    # argmin_k ||x - e_k||^2 == argmin_k (||e_k||^2 - 2 <e_k, x>) ; ||x||^2 is
    # constant per token so it is dropped from the distance used for argmin.
    cross = jnp.dot(e, x, preferred_element_type=jnp.float32)    # (K, T)  MXU
    dist = esq_ref[...] - 2.0 * cross                             # (K, T)

    # argmin over the codebook axis, first index on ties (== torch.argmin).
    min_d = jnp.min(dist, axis=0, keepdims=True)                  # (1, T)
    k_iota = jax.lax.broadcasted_iota(jnp.int32, dist.shape, 0)
    idx = jnp.min(jnp.where(dist == min_d, k_iota, n_codes),
                  axis=0, keepdims=True)                          # (1, T) int32

    # Codebook lookup as a one-hot matmul on the MXU (no gather needed).
    one_hot = (k_iota == idx).astype(jnp.float32)                 # (K, T)
    q = jnp.dot(et_ref[...], one_hot,
                preferred_element_type=jnp.float32)               # (D, T)

    # Per-token squared error (e_latent_loss == q_latent_loss numerator).
    diff = q - x
    sse = jnp.sum(diff * diff, axis=0, keepdims=True)             # (1, T)

    q_ref[...] = q
    idx_ref[...] = idx
    sse_ref[...] = sse


def _pick_tile_m(n_batch, n_tokens):
    """Lane-dense token tile: big enough to amortize per-step overhead (cap
    2048 tokens), while keeping >= 2 grid steps for v7x dual-TC sharding."""
    blocks = -(-n_tokens // 128)            # 128-lane granules per batch elem
    tile_blocks = min(16, blocks)           # <= 2048 tokens per step
    if n_batch * (-(-blocks // tile_blocks)) < 2 and blocks > 1:
        tile_blocks = -(-blocks // 2)       # split so the grid has >= 2 steps
    return 128 * tile_blocks


def vector_quantizer_forward(inputs, embedding, commitment_cost, *, tile_m=None):
    """Eval-mode forward of the PyTorch VectorQuantizer.

    inputs    : (N, C, L) or (N, C, H, W) float32, C == embedding_dim
    embedding : (num_embeddings, embedding_dim) float32
    Returns (quantized_st, vq_loss, encoding_indices) in the PyTorch layouts:
    quantized_st in NCL/NCHW, indices in (N, L) / (N, H, W).
    """
    if inputs.ndim not in (3, 4):
        raise ValueError(f"Expected 3-D or 4-D input, got {inputs.ndim}-D.")
    n, c = int(inputs.shape[0]), int(inputs.shape[1])
    spatial = tuple(int(d) for d in inputs.shape[2:])
    num_codes, dim = int(embedding.shape[0]), int(embedding.shape[1])
    if c != dim:
        raise ValueError("channel dim must equal embedding_dim")
    if dim % 8:
        raise ValueError("embedding_dim must be a multiple of 8 for this kernel")

    s = 1
    for d in spatial:
        s *= d

    if tile_m is None:
        tile_m = _pick_tile_m(n, s)
    if tile_m % 128:
        raise ValueError("tile_m must be a multiple of 128")
    n_tiles = -(-s // tile_m)
    s_pad = n_tiles * tile_m

    # Free reshape only (no transpose): channels stay second-to-last, spatial
    # tokens are already the lane axis.
    x = inputs.astype(jnp.float32).reshape(n, dim, s)
    if s_pad != s:
        x = jnp.pad(x, ((0, 0), (0, 0), (0, s_pad - s)))   # padded tokens discarded

    emb = embedding.astype(jnp.float32)                    # (K, D)
    emb_t = emb.T                                          # (D, K)
    emb_sq = jnp.sum(emb * emb, axis=1, keepdims=True)     # (K, 1)

    total = n * s_pad
    flops = 4 * total * num_codes * dim                    # two MXU matmuls / token
    bytes_accessed = 4 * (2 * dim * total                  # x in + q out
                          + 2 * num_codes * dim + num_codes
                          + 2 * total)                     # idx + sse rows

    # Scoped-VMEM budget: double-buffered x/q/idx/sse blocks, resident codebook
    # copies, plus (K, tile_m) distance / one-hot intermediates, with margin.
    block_bytes = 4 * (2 * dim * tile_m + 2 * num_codes * dim + num_codes
                       + 2 * tile_m)
    interm_bytes = 4 * 4 * num_codes * tile_m
    vmem_limit = int(min(max(2 * (2 * block_bytes + interm_bytes), 16 << 20),
                         48 << 20))

    q, idx_rows, sse_rows = pl.pallas_call(
        _vq_kernel,
        out_shape=(
            jax.ShapeDtypeStruct((n, dim, s_pad), jnp.float32),
            jax.ShapeDtypeStruct((n, 1, s_pad), jnp.int32),
            jax.ShapeDtypeStruct((n, 1, s_pad), jnp.float32),
        ),
        grid_spec=pltpu.PrefetchScalarGridSpec(
            num_scalar_prefetch=0,
            grid=(n, n_tiles),
            in_specs=[
                pl.BlockSpec((None, dim, tile_m), lambda b, i: (b, 0, i)),  # tokens
                pl.BlockSpec((num_codes, dim), lambda b, i: (0, 0)),        # codebook
                pl.BlockSpec((dim, num_codes), lambda b, i: (0, 0)),        # codebook^T
                pl.BlockSpec((num_codes, 1), lambda b, i: (0, 0)),          # ||e_k||^2
            ],
            out_specs=[
                pl.BlockSpec((None, dim, tile_m), lambda b, i: (b, 0, i)),  # quantized
                pl.BlockSpec((None, 1, tile_m), lambda b, i: (b, 0, i)),    # indices
                pl.BlockSpec((None, 1, tile_m), lambda b, i: (b, 0, i)),    # per-token SSE
            ],
        ),
        compiler_params=pltpu.CompilerParams(
            dimension_semantics=("parallel", "parallel"),
            vmem_limit_bytes=vmem_limit),
        cost_estimate=pl.CostEstimate(flops=flops, transcendentals=0,
                                      bytes_accessed=bytes_accessed),
    )(x, emb, emb_t, emb_sq)

    # Un-pad / reshape (already in the NC... layout, no transposes needed).
    quantized_st = q[:, :, :s].reshape((n, dim) + spatial)
    encoding_indices = idx_rows[:, 0, :s].reshape((n,) + spatial)
    sse = jnp.sum(sse_rows[:, 0, :s])

    mse = sse / jnp.float32(n * s * dim)          # e_latent_loss == q_latent_loss
    vq_loss = (1.0 + commitment_cost) * mse
    return quantized_st, vq_loss, encoding_indices


def _reference_forward(inputs, embedding, commitment_cost):
    """Pure-JAX reference matching the PyTorch module (eval mode)."""
    if inputs.ndim == 3:
        xp = jnp.transpose(inputs, (0, 2, 1))
    else:
        xp = jnp.transpose(inputs, (0, 2, 3, 1))
    shape = xp.shape
    d = embedding.shape[1]
    flat = xp.reshape(-1, d)
    dist = (jnp.sum(flat ** 2, axis=1, keepdims=True)
            + jnp.sum(embedding ** 2, axis=1)
            - 2.0 * jnp.dot(flat, embedding.T,
                            precision=jax.lax.Precision.HIGHEST))
    idx = jnp.argmin(dist, axis=1)
    q = embedding[idx].reshape(shape)
    e_latent = jnp.mean((jax.lax.stop_gradient(q.reshape(flat.shape)) - flat) ** 2)
    q_latent = jnp.mean((q.reshape(flat.shape) - jax.lax.stop_gradient(flat)) ** 2)
    vq_loss = e_latent + commitment_cost * q_latent
    q_st = xp + jax.lax.stop_gradient(q - xp)
    if inputs.ndim == 3:
        q_st = jnp.transpose(q_st, (0, 2, 1))
    else:
        q_st = jnp.transpose(q_st, (0, 3, 1, 2))
    return q_st, vq_loss, idx.reshape(shape[:-1])


if __name__ == "__main__":
    # Shapes consistent with a VQ-VAE-2 bottleneck: batch=2, 16x16 latent grid,
    # embedding_dim=64 channels, 128 codebook entries.
    num_embeddings, embedding_dim, commitment_cost = 128, 64, 0.25
    B, H, W = 2, 16, 16

    key = jax.random.PRNGKey(0)
    k_emb, k_assign, k_noise, k_assign2, k_noise2 = jax.random.split(key, 5)

    # Codebook init matches the module: uniform(-1/K, 1/K).
    emb = jax.random.uniform(
        k_emb, (num_embeddings, embedding_dim), dtype=jnp.float32,
        minval=-1.0 / num_embeddings, maxval=1.0 / num_embeddings)

    # ---- 4-D (NCHW) path --------------------------------------------------
    assign = jax.random.randint(k_assign, (B * H * W,), 0, num_embeddings)
    flat = emb[assign] + 2e-3 * jax.random.normal(
        k_noise, (B * H * W, embedding_dim), dtype=jnp.float32)
    inputs = jnp.transpose(flat.reshape(B, H, W, embedding_dim), (0, 3, 1, 2))

    q_st, vq_loss, idx = vector_quantizer_forward(inputs, emb, commitment_cost)
    q_st, vq_loss, idx = jax.block_until_ready((q_st, vq_loss, idx))

    ref_q, ref_loss, ref_idx = _reference_forward(inputs, emb, commitment_cost)
    np.testing.assert_array_equal(np.asarray(idx), np.asarray(ref_idx))
    np.testing.assert_allclose(np.asarray(q_st), np.asarray(ref_q),
                               rtol=1e-5, atol=1e-6)
    np.testing.assert_allclose(np.asarray(vq_loss), np.asarray(ref_loss),
                               rtol=1e-4, atol=1e-9)

    # ---- 3-D (NCL) path, non-multiple-of-128 length to exercise padding ----
    L = 100
    assign2 = jax.random.randint(k_assign2, (B * L,), 0, num_embeddings)
    flat2 = emb[assign2] + 2e-3 * jax.random.normal(
        k_noise2, (B * L, embedding_dim), dtype=jnp.float32)
    inputs2 = jnp.transpose(flat2.reshape(B, L, embedding_dim), (0, 2, 1))

    q_st2, vq_loss2, idx2 = vector_quantizer_forward(inputs2, emb, commitment_cost)
    q_st2, vq_loss2, idx2 = jax.block_until_ready((q_st2, vq_loss2, idx2))

    ref_q2, ref_loss2, ref_idx2 = _reference_forward(inputs2, emb, commitment_cost)
    np.testing.assert_array_equal(np.asarray(idx2), np.asarray(ref_idx2))
    np.testing.assert_allclose(np.asarray(q_st2), np.asarray(ref_q2),
                               rtol=1e-5, atol=1e-6)
    np.testing.assert_allclose(np.asarray(vq_loss2), np.asarray(ref_loss2),
                               rtol=1e-4, atol=1e-9)

    print("KERNEL_OK")
</pallas_src>

<mosaic_0001>
module attributes {stable_mosaic.version = 11 : i64} {
  func.func @_vq_kernel(%arg0: i32, %arg1: i32, %arg2: memref<1x64x256xf32, #tpu.memory_space<vmem>>, %arg3: memref<128x64xf32, #tpu.memory_space<vmem>>, %arg4: memref<64x128xf32, #tpu.memory_space<vmem>>, %arg5: memref<128x1xf32, #tpu.memory_space<vmem>>, %arg6: memref<1x64x256xf32, #tpu.memory_space<vmem>>, %arg7: memref<1x1x256xi32, #tpu.memory_space<vmem>>, %arg8: memref<1x1x256xf32, #tpu.memory_space<vmem>>) attributes {dimension_semantics = [#tpu.dimension_semantics<parallel>, #tpu.dimension_semantics<parallel>], iteration_bounds = array<i64: 2, 1>, scalar_prefetch = 0 : i64, scratch_operands = 0 : i64, tpu.core_type = #tpu.core_type<tc>, window_params = [{transform_indices = @transform_0, window_bounds = array<i64: 1, 64, 256>}, {pipeline_mode = #tpu.pipeline_mode<synchronous>, transform_indices = @transform_1, window_bounds = array<i64: 128, 64>}, {pipeline_mode = #tpu.pipeline_mode<synchronous>, transform_indices = @transform_2, window_bounds = array<i64: 64, 128>}, {pipeline_mode = #tpu.pipeline_mode<synchronous>, transform_indices = @transform_3, window_bounds = array<i64: 128, 1>}, {transform_indices = @transform_4, window_bounds = array<i64: 1, 64, 256>}, {transform_indices = @transform_5, window_bounds = array<i64: 1, 1, 256>}, {transform_indices = @transform_6, window_bounds = array<i64: 1, 1, 256>}]} {
    %c0 = arith.constant 0 : index
    %c0_0 = arith.constant 0 : index
    %c0_1 = arith.constant 0 : index
    %0 = vector.load %arg2[%c0, %c0_0, %c0_1] : memref<1x64x256xf32, #tpu.memory_space<vmem>>, vector<1x64x256xf32>
    %1 = vector.shape_cast %0 : vector<1x64x256xf32> to vector<64x256xf32>
    %c0_2 = arith.constant 0 : index
    %c0_3 = arith.constant 0 : index
    %2 = vector.load %arg3[%c0_2, %c0_3] : memref<128x64xf32, #tpu.memory_space<vmem>>, vector<128x64xf32>
    %cst = arith.constant dense<0.000000e+00> : vector<128x256xf32>
    %3 = tpu.matmul %2, %1, %cst {dimension_numbers = #tpu.dot_dimension_numbers<[1], [0], [0], [1], [0, 0, 1, 1], [], []>} : vector<128x64xf32>, vector<64x256xf32>, vector<128x256xf32> -> vector<128x256xf32>
    %c0_4 = arith.constant 0 : index
    %c0_5 = arith.constant 0 : index
    %4 = vector.load %arg5[%c0_4, %c0_5] : memref<128x1xf32, #tpu.memory_space<vmem>>, vector<128x1xf32>
    %cst_6 = arith.constant 2.000000e+00 : f32
    %5 = vector.broadcast %cst_6 : f32 to vector<128x256xf32>
    %6 = arith.mulf %5, %3 : vector<128x256xf32>
    %7 = vector.broadcast %4 : vector<128x1xf32> to vector<128x256xf32>
    %8 = arith.subf %7, %6 : vector<128x256xf32>
    %cst_7 = arith.constant dense<0x7F800000> : vector<256xf32>
    %9 = vector.multi_reduction <minimumf>, %8, %cst_7 [0] : vector<128x256xf32> to vector<256xf32>
    %10 = vector.shape_cast %9 : vector<256xf32> to vector<1x256xf32>
    %11 = tpu.iota {dimensions = array<i32: 0>} : vector<128x256xi32>
    %12 = vector.broadcast %10 : vector<1x256xf32> to vector<128x256xf32>
    %13 = arith.cmpf oeq, %8, %12 : vector<128x256xf32>
    %c128_i32 = arith.constant 128 : i32
    %14 = vector.broadcast %c128_i32 : i32 to vector<128x256xi32>
    %15 = arith.select %13, %11, %14 : vector<128x256xi1>, vector<128x256xi32>
    %cst_8 = arith.constant dense<2147483647> : vector<256xi32>
    %16 = vector.multi_reduction <minsi>, %15, %cst_8 [0] : vector<128x256xi32> to vector<256xi32>
    %17 = vector.shape_cast %16 : vector<256xi32> to vector<1x256xi32>
    %18 = vector.broadcast %17 : vector<1x256xi32> to vector<128x256xi32>
    %19 = arith.cmpi eq, %11, %18 : vector<128x256xi32>
    %20 = arith.extui %19 : vector<128x256xi1> to vector<128x256xi32>
    %21 = arith.sitofp %20 : vector<128x256xi32> to vector<128x256xf32>
    %c0_9 = arith.constant 0 : index
    %c0_10 = arith.constant 0 : index
    %22 = vector.load %arg4[%c0_9, %c0_10] : memref<64x128xf32, #tpu.memory_space<vmem>>, vector<64x128xf32>
    %cst_11 = arith.constant dense<0.000000e+00> : vector<64x256xf32>
    %23 = tpu.matmul %22, %21, %cst_11 {dimension_numbers = #tpu.dot_dimension_numbers<[1], [0], [0], [1], [0, 0, 1, 1], [], []>} : vector<64x128xf32>, vector<128x256xf32>, vector<64x256xf32> -> vector<64x256xf32>
    %24 = arith.subf %23, %1 : vector<64x256xf32>
    %25 = arith.mulf %24, %24 : vector<64x256xf32>
    %cst_12 = arith.constant dense<0.000000e+00> : vector<256xf32>
    %26 = vector.multi_reduction <add>, %25, %cst_12 [0] : vector<64x256xf32> to vector<256xf32>
    %27 = vector.shape_cast %26 : vector<256xf32> to vector<1x256xf32>
    %c0_13 = arith.constant 0 : index
    %c0_14 = arith.constant 0 : index
    %c0_15 = arith.constant 0 : index
    %28 = vector.load %arg6[%c0_13, %c0_14, %c0_15] : memref<1x64x256xf32, #tpu.memory_space<vmem>>, vector<1x64x256xf32>
    %29 = vector.shape_cast %28 : vector<1x64x256xf32> to vector<64x256xf32>
    %30 = vector.shape_cast %23 : vector<64x256xf32> to vector<1x64x256xf32>
    tpu.vector_store %arg6[%c0_13, %c0_14, %c0_15], %30 {strides = array<i32>} : memref<1x64x256xf32, #tpu.memory_space<vmem>>, vector<1x64x256xf32>,
    %c0_16 = arith.constant 0 : index
    %c0_17 = arith.constant 0 : index
    %c0_18 = arith.constant 0 : index
    %31 = vector.load %arg7[%c0_16, %c0_17, %c0_18] : memref<1x1x256xi32, #tpu.memory_space<vmem>>, vector<1x1x256xi32>
    %32 = vector.shape_cast %31 : vector<1x1x256xi32> to vector<1x256xi32>
    %33 = vector.shape_cast %17 : vector<1x256xi32> to vector<1x1x256xi32>
    tpu.vector_store %arg7[%c0_16, %c0_17, %c0_18], %33 {strides = array<i32>} : memref<1x1x256xi32, #tpu.memory_space<vmem>>, vector<1x1x256xi32>,
    %c0_19 = arith.constant 0 : index
    %c0_20 = arith.constant 0 : index
    %c0_21 = arith.constant 0 : index
    %34 = vector.load %arg8[%c0_19, %c0_20, %c0_21] : memref<1x1x256xf32, #tpu.memory_space<vmem>>, vector<1x1x256xf32>
    %35 = vector.shape_cast %34 : vector<1x1x256xf32> to vector<1x256xf32>
    %36 = vector.shape_cast %27 : vector<1x256xf32> to vector<1x1x256xf32>
    tpu.vector_store %arg8[%c0_19, %c0_20, %c0_21], %36 {strides = array<i32>} : memref<1x1x256xf32, #tpu.memory_space<vmem>>, vector<1x1x256xf32>,
    return
  }
  func.func @transform_0(%arg0: i32, %arg1: i32) -> (i32, i32, i32) {
    %c0_i32 = arith.constant 0 : i32
    %c0_i32_0 = arith.constant 0 : i32
    return %arg0, %c0_i32, %arg1 : i32, i32, i32
  }
  func.func @transform_1(%arg0: i32, %arg1: i32) -> (i32, i32) {
    %c0_i32 = arith.constant 0 : i32
    %c0_i32_0 = arith.constant 0 : i32
    %c0_i32_1 = arith.constant 0 : i32
    return %c0_i32, %c0_i32_0 : i32, i32
  }
  func.func @transform_2(%arg0: i32, %arg1: i32) -> (i32, i32) {
    %c0_i32 = arith.constant 0 : i32
    %c0_i32_0 = arith.constant 0 : i32
    %c0_i32_1 = arith.constant 0 : i32
    return %c0_i32, %c0_i32_0 : i32, i32
  }
  func.func @transform_3(%arg0: i32, %arg1: i32) -> (i32, i32) {
    %c0_i32 = arith.constant 0 : i32
    %c0_i32_0 = arith.constant 0 : i32
    %c0_i32_1 = arith.constant 0 : i32
    return %c0_i32, %c0_i32_0 : i32, i32
  }
  func.func @transform_4(%arg0: i32, %arg1: i32) -> (i32, i32, i32) {
    %c0_i32 = arith.constant 0 : i32
    %c0_i32_0 = arith.constant 0 : i32
    return %arg0, %c0_i32, %arg1 : i32, i32, i32
  }
  func.func @transform_5(%arg0: i32, %arg1: i32) -> (i32, i32, i32) {
    %c0_i32 = arith.constant 0 : i32
    %c0_i32_0 = arith.constant 0 : i32
    return %arg0, %c0_i32, %arg1 : i32, i32, i32
  }
  func.func @transform_6(%arg0: i32, %arg1: i32) -> (i32, i32, i32) {
    %c0_i32 = arith.constant 0 : i32
    %c0_i32_0 = arith.constant 0 : i32
    return %arg0, %c0_i32, %arg1 : i32, i32, i32
  }
}

</mosaic_0001>

<llo_original>
// kernel: tpu_custom_call.1
$region0: #{tpu_custom_call.1}
  #allocation0 [shape = 'u32[]', space=smem, size = 0x4, offset = 0x4, fixed_abs, tag = 'smem constant byte address 0x4 - core index']
  #allocation1 [shape = 'u32[144,128]{1,0:T(1,128)}', space=vmem, size = 0x12000, scoped, tag = 'internal scratch']
  %s0 = inlined_call_operand.vmem [shape: f32[2,64,256], index: 0, kind: input, shape index: {}]
  %s1 = inlined_call_operand.vmem [shape: f32[128,64], index: 1, kind: input, shape index: {}]
  %s2 = inlined_call_operand.vmem [shape: f32[64,128], index: 2, kind: input, shape index: {}]
  %s3 = inlined_call_operand.vmem [shape: f32[128,1], index: 3, kind: input, shape index: {}]
  %s4 = inlined_call_operand.hbm [shape: f32[2,64,256], index: 4, kind: output, shape index: {0}]
  %s5 = inlined_call_operand.hbm [shape: s32[2,1,256], index: 5, kind: output, shape index: {1}]
  %s6 = inlined_call_operand.hbm [shape: f32[2,1,256], index: 6, kind: output, shape index: {2}]
  %7 = xla_tuple %s4, %s5, %s6
  %s8 = sld [smem:[#allocation0]]
  $region65: #{tpu_custom_call.1} parent=0
    _
  %s10 = ssub.s32 1, %s8
  %s11 = scalar_select 0, %s10, %s8
  $region1: #{tpu_custom_call.1} parent=0
    #allocation2 [shape = 'u8[131072]{0}', space=vmem, size = 0x20000, scoped, tag = 'output window, operand 0']
    #allocation3 [shape = 's32[2]{0}', space=sflag, size = 0x8, scoped, tag = 'scoped memory for tpu_custom_call.1']
    #allocation4 [shape = 'u8[2048]{0}', space=vmem, size = 0x800, scoped, tag = 'output window, operand 1']
    #allocation5 [shape = 's32[2]{0}', space=sflag, size = 0x8, scoped, tag = 'scoped memory for tpu_custom_call.1']
    #allocation6 [shape = 'u8[2048]{0}', space=vmem, size = 0x800, scoped, tag = 'output window, operand 2']
    %12 = vsyncpa [#allocation3], 0
    %s13 = scalar_lea.sflag [#allocation3], 1
    %14 = vsyncpa %s13, 0
    %15 = vsyncpa [#allocation5], 0
    %s16 = scalar_lea.sflag [#allocation5], 1
    %17 = vsyncpa %s16, 0
    loop: start=0, step=1, limit=4
    $region2: #{tpu_custom_call.1} parent=1 // loop_pre_header
      _
    $region3: #{tpu_custom_call.1} parent=1 // loop_header
      %s19 = sphi 0, %s23
      %p20 = scmp.ge.s32.totalorder %s19, 4
      %s26 = sphi 0, %s38
      %s27 = sphi 0, %s34
      %s28 = sphi 0, %s26
      %s29 = sphi 0, %s27
      %s30 = sphi 0, %s28
      %s31 = sphi 0, %s29
      %s43 = sphi 0, %s45
      %s46 = sphi 0, %s43
      %s47 = sphi 0, %s46
      %s63 = sphi 0, %s47
      %s67 = sphi 0, %s67
      %s69 = sphi 0, %s67
      %s70 = sphi 0, %s69
      %s84 = sphi 0, %s70
      %s88 = sphi 0, %s88
      %s90 = sphi 0, %s88
      %s91 = sphi 0, %s90
      %s105 = sphi 0, %s91
      %s109 = sphi 0, %s109
      %s111 = sphi 0, %s109
      %s112 = sphi 0, %s111
      %s126 = sphi 0, %s112
      %s134 = sphi 0, %s136
      %s137 = sphi 0, %s134
      %s138 = sphi 0, %s137
      %s154 = sphi 0, %s138
      %s162 = sphi 0, %s164
      %s165 = sphi 0, %s162
      %s166 = sphi 0, %s165
      %s182 = sphi 0, %s166
      %s190 = sphi 0, %s192
      %s193 = sphi 0, %s190
      %s194 = sphi 0, %s193
      %s210 = sphi 0, %s194
    $region4: #{tpu_custom_call.1} parent=1 // loop_header_branch
      %22 = sbr.rel (%p20) target = $region8
    $region5: #{tpu_custom_call.1} parent=1 // loop_body
      %s24 = ssub.s32 %s19, 1
      %s25 = ssub.s32 %s19, 2
      %s32 = sadd.s32 1, %s27
      %p33 = scmp.ge.s32.totalorder %s32, 1
      %s34 = scalar_select %p33, 0, %s32
      %s35 = sadd.s32 1, %s26
      %s36 = scalar_select %p33, %s35, %s26
      %p37 = scmp.ge.s32.totalorder %s36, 2
      %s38 = scalar_select %p37, 0, %s36
      %s39 = ssub.s32 %s26, %s38
      %s40 = ssub.s32 %s27, %s34
      %s41 = sor.u32 %s39, %s40
      %p42 = scmp.eq.s32.totalorder %s41, 0
      %s44 = sadd.s32 %s43, 1
      %s45 = scalar_select %p42, %s43, %s44
      %p48 = pneg %p42
      %p49 = scmp.eq.s32.totalorder %s19, 1
      %p50 = por %p48, %p49
      %p51 = scmp.ne.s32.totalorder %s43, %s46
      %p52 = scmp.eq.s32.totalorder %s19, 0
      %p53 = por %p51, %p52
      %p54 = scmp.ne.s32.totalorder %s43, %s46
      %p55 = scmp.eq.s32.totalorder %s24, 1
      %p56 = por %p54, %p55
      %p57 = scmp.ne.s32.totalorder %s46, %s47
      %p58 = scmp.eq.s32.totalorder %s24, 0
      %p59 = por %p57, %p58
      %p60 = scmp.ne.s32.totalorder %s46, %s47
      %p61 = scmp.eq.s32.totalorder %s25, 1
      %p62 = por %p60, %p61
      %p64 = scmp.ne.s32.totalorder %s47, %s63
      %p65 = scmp.eq.s32.totalorder %s25, 0
      %p66 = por %p64, %p65
      %s68 = sadd.s32 %s67, 1
      %p71 = scmp.eq.s32.totalorder %s19, 1
      %p72 = scmp.ne.s32.totalorder %s67, %s69
      %p73 = scmp.eq.s32.totalorder %s19, 0
      %p74 = por %p72, %p73
      %p75 = scmp.ne.s32.totalorder %s67, %s69
      %p76 = scmp.eq.s32.totalorder %s24, 1
      %p77 = por %p75, %p76
      %p78 = scmp.ne.s32.totalorder %s69, %s70
      %p79 = scmp.eq.s32.totalorder %s24, 0
      %p80 = por %p78, %p79
      %p81 = scmp.ne.s32.totalorder %s69, %s70
      %p82 = scmp.eq.s32.totalorder %s25, 1
      %p83 = por %p81, %p82
      %p85 = scmp.ne.s32.totalorder %s70, %s84
      %p86 = scmp.eq.s32.totalorder %s25, 0
      %p87 = por %p85, %p86
      %s89 = sadd.s32 %s88, 1
      %p92 = scmp.eq.s32.totalorder %s19, 1
      %p93 = scmp.ne.s32.totalorder %s88, %s90
      %p94 = scmp.eq.s32.totalorder %s19, 0
      %p95 = por %p93, %p94
      %p96 = scmp.ne.s32.totalorder %s88, %s90
      %p97 = scmp.eq.s32.totalorder %s24, 1
      %p98 = por %p96, %p97
      %p99 = scmp.ne.s32.totalorder %s90, %s91
      %p100 = scmp.eq.s32.totalorder %s24, 0
      %p101 = por %p99, %p100
      %p102 = scmp.ne.s32.totalorder %s90, %s91
      %p103 = scmp.eq.s32.totalorder %s25, 1
      %p104 = por %p102, %p103
      %p106 = scmp.ne.s32.totalorder %s91, %s105
      %p107 = scmp.eq.s32.totalorder %s25, 0
      %p108 = por %p106, %p107
      %s110 = sadd.s32 %s109, 1
      %p113 = scmp.eq.s32.totalorder %s19, 1
      %p114 = scmp.ne.s32.totalorder %s109, %s111
      %p115 = scmp.eq.s32.totalorder %s19, 0
      %p116 = por %p114, %p115
      %p117 = scmp.ne.s32.totalorder %s109, %s111
      %p118 = scmp.eq.s32.totalorder %s24, 1
      %p119 = por %p117, %p118
      %p120 = scmp.ne.s32.totalorder %s111, %s112
      %p121 = scmp.eq.s32.totalorder %s24, 0
      %p122 = por %p120, %p121
      %p123 = scmp.ne.s32.totalorder %s111, %s112
      %p124 = scmp.eq.s32.totalorder %s25, 1
      %p125 = por %p123, %p124
      %p127 = scmp.ne.s32.totalorder %s112, %s126
      %p128 = scmp.eq.s32.totalorder %s25, 0
      %p129 = por %p127, %p128
      %s130 = ssub.s32 %s26, %s38
      %s131 = ssub.s32 %s27, %s34
      %s132 = sor.u32 %s130, %s131
      %p133 = scmp.eq.s32.totalorder %s132, 0
      %s135 = sadd.s32 %s134, 1
      %s136 = scalar_select %p133, %s134, %s135
      %p139 = pneg %p133
      %p140 = scmp.eq.s32.totalorder %s19, 1
      %p141 = por %p139, %p140
      %p142 = scmp.ne.s32.totalorder %s134, %s137
      %p143 = scmp.eq.s32.totalorder %s19, 0
      %p144 = por %p142, %p143
      %p145 = scmp.ne.s32.totalorder %s134, %s137
      %p146 = scmp.eq.s32.totalorder %s24, 1
      %p147 = por %p145, %p146
      %p148 = scmp.ne.s32.totalorder %s137, %s138
      %p149 = scmp.eq.s32.totalorder %s24, 0
      %p150 = por %p148, %p149
      %p151 = scmp.ne.s32.totalorder %s137, %s138
      %p152 = scmp.eq.s32.totalorder %s25, 1
      %p153 = por %p151, %p152
      %p155 = scmp.ne.s32.totalorder %s138, %s154
      %p156 = scmp.eq.s32.totalorder %s25, 0
      %p157 = por %p155, %p156
      %s158 = ssub.s32 %s26, %s38
      %s159 = ssub.s32 %s27, %s34
      %s160 = sor.u32 %s158, %s159
      %p161 = scmp.eq.s32.totalorder %s160, 0
      %s163 = sadd.s32 %s162, 1
      %s164 = scalar_select %p161, %s162, %s163
      %p167 = pneg %p161
      %p168 = scmp.eq.s32.totalorder %s19, 1
      %p169 = por %p167, %p168
      %p170 = scmp.ne.s32.totalorder %s162, %s165
      %p171 = scmp.eq.s32.totalorder %s19, 0
      %p172 = por %p170, %p171
      %p173 = scmp.ne.s32.totalorder %s162, %s165
      %p174 = scmp.eq.s32.totalorder %s24, 1
      %p175 = por %p173, %p174
      %p176 = scmp.ne.s32.totalorder %s165, %s166
      %p177 = scmp.eq.s32.totalorder %s24, 0
      %p178 = por %p176, %p177
      %p179 = scmp.ne.s32.totalorder %s165, %s166
      %p180 = scmp.eq.s32.totalorder %s25, 1
      %p181 = por %p179, %p180
      %p183 = scmp.ne.s32.totalorder %s166, %s182
      %p184 = scmp.eq.s32.totalorder %s25, 0
      %p185 = por %p183, %p184
      %s186 = ssub.s32 %s26, %s38
      %s187 = ssub.s32 %s27, %s34
      %s188 = sor.u32 %s186, %s187
      %p189 = scmp.eq.s32.totalorder %s188, 0
      %s191 = sadd.s32 %s190, 1
      %s192 = scalar_select %p189, %s190, %s191
      %p195 = pneg %p189
      %p196 = scmp.eq.s32.totalorder %s19, 1
      %p197 = por %p195, %p196
      %p198 = scmp.ne.s32.totalorder %s190, %s193
      %p199 = scmp.eq.s32.totalorder %s19, 0
      %p200 = por %p198, %p199
      %p201 = scmp.ne.s32.totalorder %s190, %s193
      %p202 = scmp.eq.s32.totalorder %s24, 1
      %p203 = por %p201, %p202
      %p204 = scmp.ne.s32.totalorder %s193, %s194
      %p205 = scmp.eq.s32.totalorder %s24, 0
      %p206 = por %p204, %p205
      %p207 = scmp.ne.s32.totalorder %s193, %s194
      %p208 = scmp.eq.s32.totalorder %s25, 1
      %p209 = por %p207, %p208
      %p211 = scmp.ne.s32.totalorder %s194, %s210
      %p212 = scmp.eq.s32.totalorder %s25, 0
      %p213 = por %p211, %p212
      %p214 = scmp.le.s32.totalorder 1, %s19
      %p215 = scmp.lt.s32.totalorder %s19, 3
      %p216 = pnand %p214, %p215
      %p217 = pneg %p216
      // Predicated region
      $region9: #{tpu_custom_call.1} parent=5 // pred_check
        _
      $region10: #{tpu_custom_call.1} parent=5 // pred_check_branch
        %219 = sbr.rel (%p216) target = $region12
      $region11: #{tpu_custom_call.1} parent=5 // pred_region
        %s220 = ssub.s32 %s19, 1
        // Predicated region
        $region13: #{tpu_custom_call.1} parent=11 // pred_check
          %p221 = pneg %p80
        $region14: #{tpu_custom_call.1} parent=11 // pred_check_branch
          %223 = sbr.rel (%p221) target = $region16
        $region15: #{tpu_custom_call.1} parent=11 // pred_region
          _
        $region16: #{tpu_custom_call.1} parent=11 // pred_fallthru
          _
        // Predicated region
        $region17: #{tpu_custom_call.1} parent=11 // pred_check
          %p224 = pneg %p101
        $region18: #{tpu_custom_call.1} parent=11 // pred_check_branch
          %226 = sbr.rel (%p224) target = $region20
        $region19: #{tpu_custom_call.1} parent=11 // pred_region
          _
        $region20: #{tpu_custom_call.1} parent=11 // pred_fallthru
          _
        // Predicated region
        $region21: #{tpu_custom_call.1} parent=11 // pred_check
          %p227 = pneg %p122
        $region22: #{tpu_custom_call.1} parent=11 // pred_check_branch
          %229 = sbr.rel (%p227) target = $region24
        $region23: #{tpu_custom_call.1} parent=11 // pred_region
          _
        $region24: #{tpu_custom_call.1} parent=11 // pred_fallthru
          _
      $region12: #{tpu_custom_call.1} parent=5 // pred_fallthru
        _
      %p230 = scmp.lt.s32.totalorder %s19, 2
      // Predicated region
      $region25: #{tpu_custom_call.1} parent=5 // pred_check
        %p231 = pneg %p230
      $region26: #{tpu_custom_call.1} parent=5 // pred_check_branch
        %233 = sbr.rel (%p231) target = $region28
      $region27: #{tpu_custom_call.1} parent=5 // pred_region
        // Predicated region
        $region29: #{tpu_custom_call.1} parent=27 // pred_check
          %p234 = pneg %p53
        $region30: #{tpu_custom_call.1} parent=27 // pred_check_branch
          %236 = sbr.rel (%p234) target = $region32
        $region31: #{tpu_custom_call.1} parent=27 // pred_region
          %s237 = smul.u32 2, %s27
          %p238 = scmp.lt.s32.totalorder %s26, 1
          %s239 = scalar_select %p238, %s26, 1
          %p240 = scmp.lt.s32.totalorder %s237, 1
          %s241 = scalar_select %p240, %s237, 1
          %s242 = smul.addr %s239, 16
          %s243 = sadd.s32 %s241, %s242
          %s244 = smul.addr %s243, 8
          %s245 = scalar_lea.vmem %s0, %s244
          %s246 = smul.u32 2, %s27
        $region32: #{tpu_custom_call.1} parent=27 // pred_fallthru
          _
      $region28: #{tpu_custom_call.1} parent=5 // pred_fallthru
        _
      %p247 = scmp.le.s32.totalorder 1, %s19
      %p248 = scmp.lt.s32.totalorder %s19, 3
      %p249 = pnand %p247, %p248
      %p250 = pneg %p249
      // Predicated region
      $region33: #{tpu_custom_call.1} parent=5 // pred_check
        _
      $region34: #{tpu_custom_call.1} parent=5 // pred_check_branch
        %252 = sbr.rel (%p249) target = $region36
      $region35: #{tpu_custom_call.1} parent=5 // pred_region
        %s253 = ssub.s32 %s19, 1
        %s254 = smul.u32 2, %s29
        %p255 = scmp.lt.s32.totalorder %s28, 1
        %s256 = scalar_select %p255, %s28, 1
        %p257 = scmp.lt.s32.totalorder %s254, 1
        %s258 = scalar_select %p257, %s254, 1
        %s259 = smul.addr %s256, 16
        %s260 = sadd.s32 %s258, %s259
        %s261 = smul.addr %s260, 8
        %s262 = scalar_lea.vmem %s0, %s261
        %p263 = pneg %p59
        %p264 = pneg %p56
        %p265 = pneg %p80
        %p266 = pneg %p77
        %p267 = pneg %p101
        %p268 = pneg %p98
        %p269 = pneg %p122
        %p270 = pneg %p119
        %p271 = pneg %p150
        %p272 = pneg %p147
        %s273 = sand.u32 %s137, 1
        %s274 = scalar_lea.sflag [#allocation3], %s273
        %s275 = sand.u32 %s137, 1
        %s276 = smul.addr %s275, 128
        %s277 = scalar_lea.vmem [#allocation2], %s276
        %p278 = pneg %p178
        %p279 = pneg %p175
        %s280 = sand.u32 %s24, 1
        %s281 = scalar_lea.sflag [#allocation5], %s280
        %s282 = sand.u32 %s165, 1
        %s283 = smul.addr %s282, 2
        %s284 = scalar_lea.vmem [#allocation4], %s283
        %p285 = pneg %p206
        %p286 = pneg %p203
        %s287 = sand.u32 %s24, 1
        %s288 = scalar_lea.sflag [#allocation5], %s287
        %s289 = sand.u32 %s193, 1
        %s290 = smul.addr %s289, 2
        %s291 = scalar_lea.vmem [#allocation6], %s290
        %s292 = smul.u32 2, %s29
        %p293 = scmp.lt.s32.totalorder %s28, 1
        %s294 = scalar_select %p293, %s28, 1
        %p295 = scmp.lt.s32.totalorder %s292, 1
        %s296 = scalar_select %p295, %s292, 1
        %s297 = smul.addr %s294, 16
        %s298 = sadd.s32 %s296, %s297
        %s299 = smul.addr %s298, 8
        %s300 = scalar_lea.vmem %s0, %s299
        %s301 = smul.u32 2, %s29
        %s302 = smul.u32 2, %s29
        %s303 = smul.u32 2, %s29
        %s304 = smul.u32 2, %s29
        %v305 = vld [vmem:[%s300] sm:$0xff]
        %v306 = vld [vmem:[%s300 + $0x8] sm:$0xff]
        %v307 = vld [vmem:[%s300 + $0x10] sm:$0xff]
        %v308 = vld [vmem:[%s300 + $0x18] sm:$0xff]
        %v309 = vld [vmem:[%s300 + $0x20] sm:$0xff]
        %v310 = vld [vmem:[%s300 + $0x28] sm:$0xff]
        %v311 = vld [vmem:[%s300 + $0x30] sm:$0xff]
        %v312 = vld [vmem:[%s300 + $0x38] sm:$0xff]
        %v313 = vld [vmem:[%s300 + $0x40] sm:$0xff]
        %v314 = vld [vmem:[%s300 + $0x48] sm:$0xff]
        %v315 = vld [vmem:[%s300 + $0x50] sm:$0xff]
        %v316 = vld [vmem:[%s300 + $0x58] sm:$0xff]
        %v317 = vld [vmem:[%s300 + $0x60] sm:$0xff]
        %v318 = vld [vmem:[%s300 + $0x68] sm:$0xff]
        %v319 = vld [vmem:[%s300 + $0x70] sm:$0xff]
        %v320 = vld [vmem:[%s300 + $0x78] sm:$0xff]
        %v321 = vld [vmem:[%s1] sm:$0xff]
        %v322 = vld [vmem:[%s1 + $0x8] sm:$0xff]
        %v323 = vld [vmem:[%s1 + $0x10] sm:$0xff]
        %v324 = vld [vmem:[%s1 + $0x18] sm:$0xff]
        %v325 = vld [vmem:[%s1 + $0x20] sm:$0xff]
        %v326 = vld [vmem:[%s1 + $0x28] sm:$0xff]
        %v327 = vld [vmem:[%s1 + $0x30] sm:$0xff]
        %v328 = vld [vmem:[%s1 + $0x38] sm:$0xff]
        %v329 = vld [vmem:[%s1 + $0x40] sm:$0xff]
        %v330 = vld [vmem:[%s1 + $0x48] sm:$0xff]
        %v331 = vld [vmem:[%s1 + $0x50] sm:$0xff]
        %v332 = vld [vmem:[%s1 + $0x58] sm:$0xff]
        %v333 = vld [vmem:[%s1 + $0x60] sm:$0xff]
        %v334 = vld [vmem:[%s1 + $0x68] sm:$0xff]
        %v335 = vld [vmem:[%s1 + $0x70] sm:$0xff]
        %v336 = vld [vmem:[%s1 + $0x78] sm:$0xff]
        %vm337 = vcmask 523264
        %v339 = vsel %vm337, %v321, 0
        %v342 = vsel %vm337, %v322, 0
        %v345 = vsel %vm337, %v323, 0
        %v348 = vsel %vm337, %v324, 0
        %v351 = vsel %vm337, %v325, 0
        %v354 = vsel %vm337, %v326, 0
        %v357 = vsel %vm337, %v327, 0
        %v360 = vsel %vm337, %v328, 0
        %v363 = vsel %vm337, %v329, 0
        %v366 = vsel %vm337, %v330, 0
        %v369 = vsel %vm337, %v331, 0
        %v372 = vsel %vm337, %v332, 0
        %v375 = vsel %vm337, %v333, 0
        %v378 = vsel %vm337, %v334, 0
        %v381 = vsel %vm337, %v335, 0
        %v384 = vsel %vm337, %v336, 0
        %386 = vmatprep.subr.mxu0 %v306
        %387 = vmatpush1.msra.mxu0 %v305
        %388 = vmatprep.subr.mxu0 %v308
        %389 = vmatpush1.msra.mxu0 %v307
        %390 = vmatprep.subr.mxu0 %v310
        %391 = vmatpush1.msra.mxu0 %v309
        %392 = vmatprep.subr.mxu0 %v312
        %393 = vmatpush1.msra.mxu0 %v311
        %394 = vmatprep.subr.mxu0 %v314
        %395 = vmatpush1.msra.mxu0 %v313
        %396 = vmatprep.subr.mxu0 %v316
        %397 = vmatpush1.msra.mxu0 %v315
        %398 = vmatprep.subr.mxu0 %v318
        %399 = vmatpush1.msra.mxu0 %v317
        %400 = vmatprep.subr.mxu0 %v320
        %401 = vmatpush1.msra.mxu0 %v319
        %402 = vmatprep.subr.mxu0 0.0
        %403 = vmatpush1.msra.mxu0 0.0
        %404 = vmatprep.subr.mxu0 0.0
        %405 = vmatpush1.msra.mxu0 0.0
        %406 = vmatprep.subr.mxu0 0.0
        %407 = vmatpush1.msra.mxu0 0.0
        %408 = vmatprep.subr.mxu0 0.0
        %409 = vmatpush1.msra.mxu0 0.0
        %410 = vmatprep.subr.mxu0 0.0
        %411 = vmatpush1.msra.mxu0 0.0
        %412 = vmatprep.subr.mxu0 0.0
        %413 = vmatpush1.msra.mxu0 0.0
        %414 = vmatprep.subr.mxu0 0.0
        %415 = vmatpush1.msra.mxu0 0.0
        %416 = vmatprep.subr.mxu0 0.0
        %417 = vmatpush1.msra.mxu0 0.0
        %418 = vmatprep.subr.mxu0 0.0
        %419 = vmatpush1.msra.mxu0 0.0
        %420 = vmatprep.subr.mxu0 0.0
        %421 = vmatpush1.msra.mxu0 0.0
        %422 = vmatprep.subr.mxu0 0.0
        %423 = vmatpush1.msra.mxu0 0.0
        %424 = vmatprep.subr.mxu0 0.0
        %425 = vmatpush1.msra.mxu0 0.0
        %426 = vmatprep.subr.mxu0 0.0
        %427 = vmatpush1.msra.mxu0 0.0
        %428 = vmatprep.subr.mxu0 0.0
        %429 = vmatpush1.msra.mxu0 0.0
        %430 = vmatprep.subr.mxu0 0.0
        %431 = vmatpush1.msra.mxu0 0.0
        %432 = vmatprep.subr.mxu0 0.0
        %433 = vmatpush1.msra.mxu0 0.0
        %434 = vmatprep.subr.mxu0 0.0
        %435 = vmatpush1.msra.mxu0 0.0
        %436 = vmatprep.subr.mxu0 0.0
        %437 = vmatpush1.msra.mxu0 0.0
        %438 = vmatprep.subr.mxu0 0.0
        %439 = vmatpush1.msra.mxu0 0.0
        %440 = vmatprep.subr.mxu0 0.0
        %441 = vmatpush1.msra.mxu0 0.0
        %442 = vmatprep.subr.mxu0 0.0
        %443 = vmatpush1.msra.mxu0 0.0
        %444 = vmatprep.subr.mxu0 0.0
        %445 = vmatpush1.msra.mxu0 0.0
        %446 = vmatprep.subr.mxu0 0.0
        %447 = vmatpush1.msra.mxu0 0.0
        %448 = vmatprep.subr.mxu0 0.0
        %449 = vmatpush1.msra.mxu0 0.0
        %450 = vmatprep.mubr.f32.mxu0 0.0
        %451 = vmatmul.mubr.f32.gmra.mrb[0].mxu0 %v339
        %v452 = vpop.f32.mrb[0].mxu0
        %v453 = vadd.f32 0.0, %v452
        %v454 = vpop.f32.mrb[0].mxu0
        %v455 = vadd.f32 0.0, %v454
        %456 = vmatprep.mubr.f32.mxu0 0.0
        %457 = vmatmul.mubr.f32.gmra.mrb[0].mxu0 %v342
        %v458 = vpop.f32.mrb[0].mxu0
        %v459 = vadd.f32 0.0, %v458
        %v460 = vpop.f32.mrb[0].mxu0
        %v461 = vadd.f32 0.0, %v460
        %462 = vmatprep.mubr.f32.mxu0 0.0
        %463 = vmatmul.mubr.f32.gmra.mrb[0].mxu0 %v345
        %v464 = vpop.f32.mrb[0].mxu0
        %v465 = vadd.f32 0.0, %v464
        %v466 = vpop.f32.mrb[0].mxu0
        %v467 = vadd.f32 0.0, %v466
        %468 = vmatprep.mubr.f32.mxu0 0.0
        %469 = vmatmul.mubr.f32.gmra.mrb[0].mxu0 %v348
        %v470 = vpop.f32.mrb[0].mxu0
        %v471 = vadd.f32 0.0, %v470
        %v472 = vpop.f32.mrb[0].mxu0
        %v473 = vadd.f32 0.0, %v472
        %474 = vmatprep.mubr.f32.mxu0 0.0
        %475 = vmatmul.mubr.f32.gmra.mrb[0].mxu0 %v351
        %v476 = vpop.f32.mrb[0].mxu0
        %v477 = vadd.f32 0.0, %v476
        %v478 = vpop.f32.mrb[0].mxu0
        %v479 = vadd.f32 0.0, %v478
        %480 = vmatprep.mubr.f32.mxu0 0.0
        %481 = vmatmul.mubr.f32.gmra.mrb[0].mxu0 %v354
        %v482 = vpop.f32.mrb[0].mxu0
        %v483 = vadd.f32 0.0, %v482
        %v484 = vpop.f32.mrb[0].mxu0
        %v485 = vadd.f32 0.0, %v484
        %486 = vmatprep.mubr.f32.mxu0 0.0
        %487 = vmatmul.mubr.f32.gmra.mrb[0].mxu0 %v357
        %v488 = vpop.f32.mrb[0].mxu0
        %v489 = vadd.f32 0.0, %v488
        %v490 = vpop.f32.mrb[0].mxu0
        %v491 = vadd.f32 0.0, %v490
        %492 = vmatprep.mubr.f32.mxu0 0.0
        %493 = vmatmul.mubr.f32.gmra.mrb[0].mxu0 %v360
        %v494 = vpop.f32.mrb[0].mxu0
        %v495 = vadd.f32 0.0, %v494
        %v496 = vpop.f32.mrb[0].mxu0
        %v497 = vadd.f32 0.0, %v496
        %498 = vmatprep.mubr.f32.mxu0 0.0
        %499 = vmatmul.mubr.f32.gmra.mrb[0].mxu0 %v363
        %v500 = vpop.f32.mrb[0].mxu0
        %v501 = vadd.f32 0.0, %v500
        %v502 = vpop.f32.mrb[0].mxu0
        %v503 = vadd.f32 0.0, %v502
        %504 = vmatprep.mubr.f32.mxu0 0.0
        %505 = vmatmul.mubr.f32.gmra.mrb[0].mxu0 %v366
        %v506 = vpop.f32.mrb[0].mxu0
        %v507 = vadd.f32 0.0, %v506
        %v508 = vpop.f32.mrb[0].mxu0
        %v509 = vadd.f32 0.0, %v508
        %510 = vmatprep.mubr.f32.mxu0 0.0
        %511 = vmatmul.mubr.f32.gmra.mrb[0].mxu0 %v369
        %v512 = vpop.f32.mrb[0].mxu0
        %v513 = vadd.f32 0.0, %v512
        %v514 = vpop.f32.mrb[0].mxu0
        %v515 = vadd.f32 0.0, %v514
        %516 = vmatprep.mubr.f32.mxu0 0.0
        %517 = vmatmul.mubr.f32.gmra.mrb[0].mxu0 %v372
        %v518 = vpop.f32.mrb[0].mxu0
        %v519 = vadd.f32 0.0, %v518
        %v520 = vpop.f32.mrb[0].mxu0
        %v521 = vadd.f32 0.0, %v520
        %522 = vmatprep.mubr.f32.mxu0 0.0
        %523 = vmatmul.mubr.f32.gmra.mrb[0].mxu0 %v375
        %v524 = vpop.f32.mrb[0].mxu0
        %v525 = vadd.f32 0.0, %v524
        %v526 = vpop.f32.mrb[0].mxu0
        %v527 = vadd.f32 0.0, %v526
        %528 = vmatprep.mubr.f32.mxu0 0.0
        %529 = vmatmul.mubr.f32.gmra.mrb[0].mxu0 %v378
        %v530 = vpop.f32.mrb[0].mxu0
        %v531 = vadd.f32 0.0, %v530
        %v532 = vpop.f32.mrb[0].mxu0
        %v533 = vadd.f32 0.0, %v532
        %534 = vmatprep.mubr.f32.mxu0 0.0
        %535 = vmatmul.mubr.f32.gmra.mrb[0].mxu0 %v381
        %v536 = vpop.f32.mrb[0].mxu0
        %v537 = vadd.f32 0.0, %v536
        %v538 = vpop.f32.mrb[0].mxu0
        %v539 = vadd.f32 0.0, %v538
        %540 = vmatprep.mubr.f32.mxu0 0.0
        %541 = vmatmul.mubr.f32.gmra.mrb[0].mxu0 %v384
        %v542 = vpop.f32.mrb[0].mxu0
        %v543 = vadd.f32 0.0, %v542
        %v544 = vpop.f32.mrb[0].mxu0
        %v545 = vadd.f32 0.0, %v544
        %546 = vdwg.mxu0
        %v547 = vld [vmem:[%s3] sm:$0xff]
        %v548 = vld [vmem:[%s3 + $0x8] sm:$0xff]
        %v549 = vld [vmem:[%s3 + $0x10] sm:$0xff]
        %v550 = vld [vmem:[%s3 + $0x18] sm:$0xff]
        %v551 = vld [vmem:[%s3 + $0x20] sm:$0xff]
        %v552 = vld [vmem:[%s3 + $0x28] sm:$0xff]
        %v553 = vld [vmem:[%s3 + $0x30] sm:$0xff]
        %v554 = vld [vmem:[%s3 + $0x38] sm:$0xff]
        %v555 = vld [vmem:[%s3 + $0x40] sm:$0xff]
        %v556 = vld [vmem:[%s3 + $0x48] sm:$0xff]
        %v557 = vld [vmem:[%s3 + $0x50] sm:$0xff]
        %v558 = vld [vmem:[%s3 + $0x58] sm:$0xff]
        %v559 = vld [vmem:[%s3 + $0x60] sm:$0xff]
        %v560 = vld [vmem:[%s3 + $0x68] sm:$0xff]
        %v561 = vld [vmem:[%s3 + $0x70] sm:$0xff]
        %v562 = vld [vmem:[%s3 + $0x78] sm:$0xff]
        %v563 = vmul.f32 %v453, 2.0
        %v564 = vmul.f32 %v455, 2.0
        %v565 = vmul.f32 %v459, 2.0
        %v566 = vmul.f32 %v461, 2.0
        %v567 = vmul.f32 %v465, 2.0
        %v568 = vmul.f32 %v467, 2.0
        %v569 = vmul.f32 %v471, 2.0
        %v570 = vmul.f32 %v473, 2.0
        %v571 = vmul.f32 %v477, 2.0
        %v572 = vmul.f32 %v479, 2.0
        %v573 = vmul.f32 %v483, 2.0
        %v574 = vmul.f32 %v485, 2.0
        %v575 = vmul.f32 %v489, 2.0
        %v576 = vmul.f32 %v491, 2.0
        %v577 = vmul.f32 %v495, 2.0
        %v578 = vmul.f32 %v497, 2.0
        %v579 = vmul.f32 %v501, 2.0
        %v580 = vmul.f32 %v503, 2.0
        %v581 = vmul.f32 %v507, 2.0
        %v582 = vmul.f32 %v509, 2.0
        %v583 = vmul.f32 %v513, 2.0
        %v584 = vmul.f32 %v515, 2.0
        %v585 = vmul.f32 %v519, 2.0
        %v586 = vmul.f32 %v521, 2.0
        %v587 = vmul.f32 %v525, 2.0
        %v588 = vmul.f32 %v527, 2.0
        %v589 = vmul.f32 %v531, 2.0
        %v590 = vmul.f32 %v533, 2.0
        %v591 = vmul.f32 %v537, 2.0
        %v592 = vmul.f32 %v539, 2.0
        %v593 = vmul.f32 %v543, 2.0
        %v594 = vmul.f32 %v545, 2.0
        %596 = vset.pattern.permute.xlu0 0
        %597 = vperm.xlu0 %596, %v547
        %v598 = vpop.permute.xlu0 %597
        %601 = vset.pattern.permute.xlu0 0
        %602 = vperm.xlu0 %601, %v548
        %v603 = vpop.permute.xlu0 %602
        %606 = vset.pattern.permute.xlu0 0
        %607 = vperm.xlu0 %606, %v549
        %v608 = vpop.permute.xlu0 %607
        %611 = vset.pattern.permute.xlu0 0
        %612 = vperm.xlu0 %611, %v550
        %v613 = vpop.permute.xlu0 %612
        %616 = vset.pattern.permute.xlu0 0
        %617 = vperm.xlu0 %616, %v551
        %v618 = vpop.permute.xlu0 %617
        %621 = vset.pattern.permute.xlu0 0
        %622 = vperm.xlu0 %621, %v552
        %v623 = vpop.permute.xlu0 %622
        %626 = vset.pattern.permute.xlu0 0
        %627 = vperm.xlu0 %626, %v553
        %v628 = vpop.permute.xlu0 %627
        %631 = vset.pattern.permute.xlu0 0
        %632 = vperm.xlu0 %631, %v554
        %v633 = vpop.permute.xlu0 %632
        %636 = vset.pattern.permute.xlu0 0
        %637 = vperm.xlu0 %636, %v555
        %v638 = vpop.permute.xlu0 %637
        %641 = vset.pattern.permute.xlu0 0
        %642 = vperm.xlu0 %641, %v556
        %v643 = vpop.permute.xlu0 %642
        %646 = vset.pattern.permute.xlu0 0
        %647 = vperm.xlu0 %646, %v557
        %v648 = vpop.permute.xlu0 %647
        %651 = vset.pattern.permute.xlu0 0
        %652 = vperm.xlu0 %651, %v558
        %v653 = vpop.permute.xlu0 %652
        %656 = vset.pattern.permute.xlu0 0
        %657 = vperm.xlu0 %656, %v559
        %v658 = vpop.permute.xlu0 %657
        %661 = vset.pattern.permute.xlu0 0
        %662 = vperm.xlu0 %661, %v560
        %v663 = vpop.permute.xlu0 %662
        %666 = vset.pattern.permute.xlu0 0
        %667 = vperm.xlu0 %666, %v561
        %v668 = vpop.permute.xlu0 %667
        %671 = vset.pattern.permute.xlu0 0
        %672 = vperm.xlu0 %671, %v562
        %v673 = vpop.permute.xlu0 %672
        %v675 = vsub.f32 %v598, %v563
        %v676 = vsub.f32 %v598, %v564
        %v677 = vsub.f32 %v603, %v565
        %v678 = vsub.f32 %v603, %v566
        %v679 = vsub.f32 %v608, %v567
        %v680 = vsub.f32 %v608, %v568
        %v681 = vsub.f32 %v613, %v569
        %v682 = vsub.f32 %v613, %v570
        %v683 = vsub.f32 %v618, %v571
        %v684 = vsub.f32 %v618, %v572
        %v685 = vsub.f32 %v623, %v573
        %v686 = vsub.f32 %v623, %v574
        %v687 = vsub.f32 %v628, %v575
        %v688 = vsub.f32 %v628, %v576
        %v689 = vsub.f32 %v633, %v577
        %v690 = vsub.f32 %v633, %v578
        %v691 = vsub.f32 %v638, %v579
        %v692 = vsub.f32 %v638, %v580
        %v693 = vsub.f32 %v643, %v581
        %v694 = vsub.f32 %v643, %v582
        %v695 = vsub.f32 %v648, %v583
        %v696 = vsub.f32 %v648, %v584
        %v697 = vsub.f32 %v653, %v585
        %v698 = vsub.f32 %v653, %v586
        %v699 = vsub.f32 %v658, %v587
        %v700 = vsub.f32 %v658, %v588
        %v701 = vsub.f32 %v663, %v589
        %v702 = vsub.f32 %v663, %v590
        %v703 = vsub.f32 %v668, %v591
        %v704 = vsub.f32 %v668, %v592
        %v705 = vsub.f32 %v673, %v593
        %v706 = vsub.f32 %v673, %v594
        %v707 = vmin.f32 %v675, %v679
        %v708 = vmin.f32 %v677, %v681
        %v709 = vmin.f32 %v707, %v683
        %v710 = vmin.f32 %v708, %v685
        %v711 = vmin.f32 %v709, %v687
        %v712 = vmin.f32 %v710, %v689
        %v713 = vmin.f32 %v711, %v691
        %v714 = vmin.f32 %v712, %v693
        %v715 = vmin.f32 %v713, %v695
        %v716 = vmin.f32 %v714, %v697
        %v717 = vmin.f32 %v715, %v699
        %v718 = vmin.f32 %v716, %v701
        %v719 = vmin.f32 %v717, %v703
        %v720 = vmin.f32 %v718, %v705
        %v721 = vmin.f32 %v719, %v720
        %v722 = vrot.slane %v721, 4
        %v723 = vmin.f32 %v721, %v722
        %v724 = vrot.slane %v723, 2
        %v725 = vmin.f32 %v723, %v724
        %v726 = vrot.slane %v725, 1
        %v727 = vmin.f32 %v725, %v726
        %v728 = vmin.f32 %v676, %v680
        %v729 = vmin.f32 %v678, %v682
        %v730 = vmin.f32 %v728, %v684
        %v731 = vmin.f32 %v729, %v686
        %v732 = vmin.f32 %v730, %v688
        %v733 = vmin.f32 %v731, %v690
        %v734 = vmin.f32 %v732, %v692
        %v735 = vmin.f32 %v733, %v694
        %v736 = vmin.f32 %v734, %v696
        %v737 = vmin.f32 %v735, %v698
        %v738 = vmin.f32 %v736, %v700
        %v739 = vmin.f32 %v737, %v702
        %v740 = vmin.f32 %v738, %v704
        %v741 = vmin.f32 %v739, %v706
        %v742 = vmin.f32 %v740, %v741
        %v743 = vrot.slane %v742, 4
        %v744 = vmin.f32 %v742, %v743
        %v745 = vrot.slane %v744, 2
        %v746 = vmin.f32 %v744, %v745
        %v747 = vrot.slane %v746, 1
        %v748 = vmin.f32 %v746, %v747
        %v749 = vlaneseq
        %v750 = vshrl.u32 %v749, 7
        %v751 = vadd.s32 %v750, 8
        %v752 = vadd.s32 %v750, 16
        %v753 = vadd.s32 %v750, 24
        %v754 = vadd.s32 %v750, 32
        %v755 = vadd.s32 %v750, 40
        %v756 = vadd.s32 %v750, 48
        %v757 = vadd.s32 %v750, 56
        %v758 = vadd.s32 %v750, 64
        %v759 = vadd.s32 %v750, 72
        %v760 = vadd.s32 %v750, 80
        %v761 = vadd.s32 %v750, 88
        %v762 = vadd.s32 %v750, 96
        %v763 = vadd.s32 %v750, 104
        %v764 = vadd.s32 %v750, 112
        %v765 = vadd.s32 %v750, 120
        %vm766 = vcmp.eq.f32.partialorder %v675, %v727
        %vm767 = vcmp.eq.f32.partialorder %v676, %v748
        %vm768 = vcmp.eq.f32.partialorder %v677, %v727
        %vm769 = vcmp.eq.f32.partialorder %v678, %v748
        %vm770 = vcmp.eq.f32.partialorder %v679, %v727
        %vm771 = vcmp.eq.f32.partialorder %v680, %v748
        %vm772 = vcmp.eq.f32.partialorder %v681, %v727
        %vm773 = vcmp.eq.f32.partialorder %v682, %v748
        %vm774 = vcmp.eq.f32.partialorder %v683, %v727
        %vm775 = vcmp.eq.f32.partialorder %v684, %v748
        %vm776 = vcmp.eq.f32.partialorder %v685, %v727
        %vm777 = vcmp.eq.f32.partialorder %v686, %v748
        %vm778 = vcmp.eq.f32.partialorder %v687, %v727
        %vm779 = vcmp.eq.f32.partialorder %v688, %v748
        %vm780 = vcmp.eq.f32.partialorder %v689, %v727
        %vm781 = vcmp.eq.f32.partialorder %v690, %v748
        %vm782 = vcmp.eq.f32.partialorder %v691, %v727
        %vm783 = vcmp.eq.f32.partialorder %v692, %v748
        %vm784 = vcmp.eq.f32.partialorder %v693, %v727
        %vm785 = vcmp.eq.f32.partialorder %v694, %v748
        %vm786 = vcmp.eq.f32.partialorder %v695, %v727
        %vm787 = vcmp.eq.f32.partialorder %v696, %v748
        %vm788 = vcmp.eq.f32.partialorder %v697, %v727
        %vm789 = vcmp.eq.f32.partialorder %v698, %v748
        %vm790 = vcmp.eq.f32.partialorder %v699, %v727
        %vm791 = vcmp.eq.f32.partialorder %v700, %v748
        %vm792 = vcmp.eq.f32.partialorder %v701, %v727
        %vm793 = vcmp.eq.f32.partialorder %v702, %v748
        %vm794 = vcmp.eq.f32.partialorder %v703, %v727
        %vm795 = vcmp.eq.f32.partialorder %v704, %v748
        %vm796 = vcmp.eq.f32.partialorder %v705, %v727
        %vm797 = vcmp.eq.f32.partialorder %v706, %v748
        %v798 = vsel %vm766, %v750, 128
        %v799 = vsel %vm767, %v750, 128
        %v800 = vsel %vm768, %v751, 128
        %v801 = vsel %vm769, %v751, 128
        %v802 = vsel %vm770, %v752, 128
        %v803 = vsel %vm771, %v752, 128
        %v804 = vsel %vm772, %v753, 128
        %v805 = vsel %vm773, %v753, 128
        %v806 = vsel %vm774, %v754, 128
        %v807 = vsel %vm775, %v754, 128
        %v808 = vsel %vm776, %v755, 128
        %v809 = vsel %vm777, %v755, 128
        %v810 = vsel %vm778, %v756, 128
        %v811 = vsel %vm779, %v756, 128
        %v812 = vsel %vm780, %v757, 128
        %v813 = vsel %vm781, %v757, 128
        %v814 = vsel %vm782, %v758, 128
        %v815 = vsel %vm783, %v758, 128
        %v816 = vsel %vm784, %v759, 128
        %v817 = vsel %vm785, %v759, 128
        %v818 = vsel %vm786, %v760, 128
        %v819 = vsel %vm787, %v760, 128
        %v820 = vsel %vm788, %v761, 128
        %v821 = vsel %vm789, %v761, 128
        %v822 = vsel %vm790, %v762, 128
        %v823 = vsel %vm791, %v762, 128
        %v824 = vsel %vm792, %v763, 128
        %v825 = vsel %vm793, %v763, 128
        %v826 = vsel %vm794, %v764, 128
        %v827 = vsel %vm795, %v764, 128
        %v828 = vsel %vm796, %v765, 128
        %v829 = vsel %vm797, %v765, 128
        %vm830 = vcmp.lt.s32.totalorder %v798, %v802
        %v831 = vsel %vm830, %v798, %v802
        %vm832 = vcmp.lt.s32.totalorder %v800, %v804
        %v833 = vsel %vm832, %v800, %v804
        %vm834 = vcmp.lt.s32.totalorder %v831, %v806
        %v835 = vsel %vm834, %v831, %v806
        %vm836 = vcmp.lt.s32.totalorder %v833, %v808
        %v837 = vsel %vm836, %v833, %v808
        %vm838 = vcmp.lt.s32.totalorder %v835, %v810
        %v839 = vsel %vm838, %v835, %v810
        %vm840 = vcmp.lt.s32.totalorder %v837, %v812
        %v841 = vsel %vm840, %v837, %v812
        %vm842 = vcmp.lt.s32.totalorder %v839, %v814
        %v843 = vsel %vm842, %v839, %v814
        %vm844 = vcmp.lt.s32.totalorder %v841, %v816
        %v845 = vsel %vm844, %v841, %v816
        %vm846 = vcmp.lt.s32.totalorder %v843, %v818
        %v847 = vsel %vm846, %v843, %v818
        %vm848 = vcmp.lt.s32.totalorder %v845, %v820
        %v849 = vsel %vm848, %v845, %v820
        %vm850 = vcmp.lt.s32.totalorder %v847, %v822
        %v851 = vsel %vm850, %v847, %v822
        %vm852 = vcmp.lt.s32.totalorder %v849, %v824
        %v853 = vsel %vm852, %v849, %v824
        %vm854 = vcmp.lt.s32.totalorder %v851, %v826
        %v855 = vsel %vm854, %v851, %v826
        %vm856 = vcmp.lt.s32.totalorder %v853, %v828
        %v857 = vsel %vm856, %v853, %v828
        %vm858 = vcmp.lt.s32.totalorder %v855, %v857
        %v859 = vsel %vm858, %v855, %v857
        %v860 = vrot.slane %v859, 4
        %vm861 = vcmp.lt.s32.totalorder %v859, %v860
        %v862 = vsel %vm861, %v859, %v860
        %v863 = vrot.slane %v862, 2
        %vm864 = vcmp.lt.s32.totalorder %v862, %v863
        %v865 = vsel %vm864, %v862, %v863
        %v866 = vrot.slane %v865, 1
        %vm867 = vcmp.lt.s32.totalorder %v865, %v866
        %v868 = vsel %vm867, %v865, %v866
        %vm869 = vcmp.lt.s32.totalorder %v799, %v803
        %v870 = vsel %vm869, %v799, %v803
        %vm871 = vcmp.lt.s32.totalorder %v801, %v805
        %v872 = vsel %vm871, %v801, %v805
        %vm873 = vcmp.lt.s32.totalorder %v870, %v807
        %v874 = vsel %vm873, %v870, %v807
        %vm875 = vcmp.lt.s32.totalorder %v872, %v809
        %v876 = vsel %vm875, %v872, %v809
        %vm877 = vcmp.lt.s32.totalorder %v874, %v811
        %v878 = vsel %vm877, %v874, %v811
        %vm879 = vcmp.lt.s32.totalorder %v876, %v813
        %v880 = vsel %vm879, %v876, %v813
        %vm881 = vcmp.lt.s32.totalorder %v878, %v815
        %v882 = vsel %vm881, %v878, %v815
        %vm883 = vcmp.lt.s32.totalorder %v880, %v817
        %v884 = vsel %vm883, %v880, %v817
        %vm885 = vcmp.lt.s32.totalorder %v882, %v819
        %v886 = vsel %vm885, %v882, %v819
        %vm887 = vcmp.lt.s32.totalorder %v884, %v821
        %v888 = vsel %vm887, %v884, %v821
        %vm889 = vcmp.lt.s32.totalorder %v886, %v823
        %v890 = vsel %vm889, %v886, %v823
        %vm891 = vcmp.lt.s32.totalorder %v888, %v825
        %v892 = vsel %vm891, %v888, %v825
        %vm893 = vcmp.lt.s32.totalorder %v890, %v827
        %v894 = vsel %vm893, %v890, %v827
        %vm895 = vcmp.lt.s32.totalorder %v892, %v829
        %v896 = vsel %vm895, %v892, %v829
        %vm897 = vcmp.lt.s32.totalorder %v894, %v896
        %v898 = vsel %vm897, %v894, %v896
        %v899 = vrot.slane %v898, 4
        %vm900 = vcmp.lt.s32.totalorder %v898, %v899
        %v901 = vsel %vm900, %v898, %v899
        %v902 = vrot.slane %v901, 2
        %vm903 = vcmp.lt.s32.totalorder %v901, %v902
        %v904 = vsel %vm903, %v901, %v902
        %v905 = vrot.slane %v904, 1
        %vm906 = vcmp.lt.s32.totalorder %v904, %v905
        %v907 = vsel %vm906, %v904, %v905
        %vm908 = vcmp.eq.s32.totalorder %v750, %v868
        %vm909 = vcmp.eq.s32.totalorder %v750, %v907
        %vm910 = vcmp.eq.s32.totalorder %v751, %v868
        %vm911 = vcmp.eq.s32.totalorder %v751, %v907
        %vm912 = vcmp.eq.s32.totalorder %v752, %v868
        %vm913 = vcmp.eq.s32.totalorder %v752, %v907
        %vm914 = vcmp.eq.s32.totalorder %v753, %v868
        %vm915 = vcmp.eq.s32.totalorder %v753, %v907
        %vm916 = vcmp.eq.s32.totalorder %v754, %v868
        %vm917 = vcmp.eq.s32.totalorder %v754, %v907
        %vm918 = vcmp.eq.s32.totalorder %v755, %v868
        %vm919 = vcmp.eq.s32.totalorder %v755, %v907
        %vm920 = vcmp.eq.s32.totalorder %v756, %v868
        %vm921 = vcmp.eq.s32.totalorder %v756, %v907
        %vm922 = vcmp.eq.s32.totalorder %v757, %v868
        %vm923 = vcmp.eq.s32.totalorder %v757, %v907
        %vm924 = vcmp.eq.s32.totalorder %v758, %v868
        %vm925 = vcmp.eq.s32.totalorder %v758, %v907
        %vm926 = vcmp.eq.s32.totalorder %v759, %v868
        %vm927 = vcmp.eq.s32.totalorder %v759, %v907
        %vm928 = vcmp.eq.s32.totalorder %v760, %v868
        %vm929 = vcmp.eq.s32.totalorder %v760, %v907
        %vm930 = vcmp.eq.s32.totalorder %v761, %v868
        %vm931 = vcmp.eq.s32.totalorder %v761, %v907
        %vm932 = vcmp.eq.s32.totalorder %v762, %v868
        %vm933 = vcmp.eq.s32.totalorder %v762, %v907
        %vm934 = vcmp.eq.s32.totalorder %v763, %v868
        %vm935 = vcmp.eq.s32.totalorder %v763, %v907
        %vm936 = vcmp.eq.s32.totalorder %v764, %v868
        %vm937 = vcmp.eq.s32.totalorder %v764, %v907
        %vm938 = vcmp.eq.s32.totalorder %v765, %v868
        %vm939 = vcmp.eq.s32.totalorder %v765, %v907
        %v940 = vsel %vm908, 1, 0
        %v941 = vsel %vm909, 1, 0
        %v942 = vsel %vm910, 1, 0
        %v943 = vsel %vm911, 1, 0
        %v944 = vsel %vm912, 1, 0
        %v945 = vsel %vm913, 1, 0
        %v946 = vsel %vm914, 1, 0
        %v947 = vsel %vm915, 1, 0
        %v948 = vsel %vm916, 1, 0
        %v949 = vsel %vm917, 1, 0
        %v950 = vsel %vm918, 1, 0
        %v951 = vsel %vm919, 1, 0
        %v952 = vsel %vm920, 1, 0
        %v953 = vsel %vm921, 1, 0
        %v954 = vsel %vm922, 1, 0
        %v955 = vsel %vm923, 1, 0
        %v956 = vsel %vm924, 1, 0
        %v957 = vsel %vm925, 1, 0
        %v958 = vsel %vm926, 1, 0
        %v959 = vsel %vm927, 1, 0
        %v960 = vsel %vm928, 1, 0
        %v961 = vsel %vm929, 1, 0
        %v962 = vsel %vm930, 1, 0
        %v963 = vsel %vm931, 1, 0
        %v964 = vsel %vm932, 1, 0
        %v965 = vsel %vm933, 1, 0
        %v966 = vsel %vm934, 1, 0
        %v967 = vsel %vm935, 1, 0
        %v968 = vsel %vm936, 1, 0
        %v969 = vsel %vm937, 1, 0
        %v970 = vsel %vm938, 1, 0
        %v971 = vsel %vm939, 1, 0
        %v972 = vcvt.s32.f32 %v940
        %v973 = vcvt.s32.f32 %v941
        %v974 = vcvt.s32.f32 %v942
        %v975 = vcvt.s32.f32 %v943
        %v976 = vcvt.s32.f32 %v944
        %v977 = vcvt.s32.f32 %v945
        %v978 = vcvt.s32.f32 %v946
        %v979 = vcvt.s32.f32 %v947
        %v980 = vcvt.s32.f32 %v948
        %v981 = vcvt.s32.f32 %v949
        %v982 = vcvt.s32.f32 %v950
        %v983 = vcvt.s32.f32 %v951
        %v984 = vcvt.s32.f32 %v952
        %v985 = vcvt.s32.f32 %v953
        %v986 = vcvt.s32.f32 %v954
        %v987 = vcvt.s32.f32 %v955
        %v988 = vcvt.s32.f32 %v956
        %v989 = vcvt.s32.f32 %v957
        %v990 = vcvt.s32.f32 %v958
        %v991 = vcvt.s32.f32 %v959
        %v992 = vcvt.s32.f32 %v960
        %v993 = vcvt.s32.f32 %v961
        %v994 = vcvt.s32.f32 %v962
        %v995 = vcvt.s32.f32 %v963
        %v996 = vcvt.s32.f32 %v964
        %v997 = vcvt.s32.f32 %v965
        %v998 = vcvt.s32.f32 %v966
        %v999 = vcvt.s32.f32 %v967
        %v1000 = vcvt.s32.f32 %v968
        %v1001 = vcvt.s32.f32 %v969
        %v1002 = vcvt.s32.f32 %v970
        %v1003 = vcvt.s32.f32 %v971
        %v1004 = vld [vmem:[%s2] sm:$0xff]
        %v1005 = vld [vmem:[%s2 + $0x8] sm:$0xff]
        %v1006 = vld [vmem:[%s2 + $0x10] sm:$0xff]
        %v1007 = vld [vmem:[%s2 + $0x18] sm:$0xff]
        %v1008 = vld [vmem:[%s2 + $0x20] sm:$0xff]
        %v1009 = vld [vmem:[%s2 + $0x28] sm:$0xff]
        %v1010 = vld [vmem:[%s2 + $0x30] sm:$0xff]
        %v1011 = vld [vmem:[%s2 + $0x38] sm:$0xff]
        %1012 = vmatprep.subr.mxu0 %v973
        %1013 = vmatpush1.msra.mxu0 %v972
        %1014 = vmatprep.subr.mxu0 %v975
        %1015 = vmatpush1.msra.mxu0 %v974
        %1016 = vmatprep.subr.mxu0 %v977
        %1017 = vmatpush1.msra.mxu0 %v976
        %1018 = vmatprep.subr.mxu0 %v979
        %1019 = vmatpush1.msra.mxu0 %v978
        %1020 = vmatprep.subr.mxu0 %v981
        %1021 = vmatpush1.msra.mxu0 %v980
        %1022 = vmatprep.subr.mxu0 %v983
        %1023 = vmatpush1.msra.mxu0 %v982
        %1024 = vmatprep.subr.mxu0 %v985
        %1025 = vmatpush1.msra.mxu0 %v984
        %1026 = vmatprep.subr.mxu0 %v987
        %1027 = vmatpush1.msra.mxu0 %v986
        %1028 = vmatprep.subr.mxu0 %v989
        %1029 = vmatpush1.msra.mxu0 %v988
        %1030 = vmatprep.subr.mxu0 %v991
        %1031 = vmatpush1.msra.mxu0 %v990
        %1032 = vmatprep.subr.mxu0 %v993
        %1033 = vmatpush1.msra.mxu0 %v992
        %1034 = vmatprep.subr.mxu0 %v995
        %1035 = vmatpush1.msra.mxu0 %v994
        %1036 = vmatprep.subr.mxu0 %v997
        %1037 = vmatpush1.msra.mxu0 %v996
        %1038 = vmatprep.subr.mxu0 %v999
        %1039 = vmatpush1.msra.mxu0 %v998
        %1040 = vmatprep.subr.mxu0 %v1001
        %1041 = vmatpush1.msra.mxu0 %v1000
        %1042 = vmatprep.subr.mxu0 %v1003
        %1043 = vmatpush1.msra.mxu0 %v1002
        %1044 = vmatprep.subr.mxu0 0.0
        %1045 = vmatpush1.msra.mxu0 0.0
        %1046 = vmatprep.subr.mxu0 0.0
        %1047 = vmatpush1.msra.mxu0 0.0
        %1048 = vmatprep.subr.mxu0 0.0
        %1049 = vmatpush1.msra.mxu0 0.0
        %1050 = vmatprep.subr.mxu0 0.0
        %1051 = vmatpush1.msra.mxu0 0.0
        %1052 = vmatprep.subr.mxu0 0.0
        %1053 = vmatpush1.msra.mxu0 0.0
        %1054 = vmatprep.subr.mxu0 0.0
        %1055 = vmatpush1.msra.mxu0 0.0
        %1056 = vmatprep.subr.mxu0 0.0
        %1057 = vmatpush1.msra.mxu0 0.0
        %1058 = vmatprep.subr.mxu0 0.0
        %1059 = vmatpush1.msra.mxu0 0.0
        %1060 = vmatprep.subr.mxu0 0.0
        %1061 = vmatpush1.msra.mxu0 0.0
        %1062 = vmatprep.subr.mxu0 0.0
        %1063 = vmatpush1.msra.mxu0 0.0
        %1064 = vmatprep.subr.mxu0 0.0
        %1065 = vmatpush1.msra.mxu0 0.0
        %1066 = vmatprep.subr.mxu0 0.0
        %1067 = vmatpush1.msra.mxu0 0.0
        %1068 = vmatprep.subr.mxu0 0.0
        %1069 = vmatpush1.msra.mxu0 0.0
        %1070 = vmatprep.subr.mxu0 0.0
        %1071 = vmatpush1.msra.mxu0 0.0
        %1072 = vmatprep.subr.mxu0 0.0
        %1073 = vmatpush1.msra.mxu0 0.0
        %1074 = vmatprep.subr.mxu0 0.0
        %1075 = vmatpush1.msra.mxu0 0.0
        %1076 = vmatprep.mubr.f32.mxu0 0.0
        %1077 = vmatmul.mubr.f32.gmra.mrb[0].mxu0 %v1004
        %v1078 = vpop.f32.mrb[0].mxu0
        %v1079 = vadd.f32 0.0, %v1078
        %v1080 = vpop.f32.mrb[0].mxu0
        %v1081 = vadd.f32 0.0, %v1080
        %1082 = vmatprep.mubr.f32.mxu0 0.0
        %1083 = vmatmul.mubr.f32.gmra.mrb[0].mxu0 %v1005
        %v1084 = vpop.f32.mrb[0].mxu0
        %v1085 = vadd.f32 0.0, %v1084
        %v1086 = vpop.f32.mrb[0].mxu0
        %v1087 = vadd.f32 0.0, %v1086
        %1088 = vmatprep.mubr.f32.mxu0 0.0
        %1089 = vmatmul.mubr.f32.gmra.mrb[0].mxu0 %v1006
        %v1090 = vpop.f32.mrb[0].mxu0
        %v1091 = vadd.f32 0.0, %v1090
        %v1092 = vpop.f32.mrb[0].mxu0
        %v1093 = vadd.f32 0.0, %v1092
        %1094 = vmatprep.mubr.f32.mxu0 0.0
        %1095 = vmatmul.mubr.f32.gmra.mrb[0].mxu0 %v1007
        %v1096 = vpop.f32.mrb[0].mxu0
        %v1097 = vadd.f32 0.0, %v1096
        %v1098 = vpop.f32.mrb[0].mxu0
        %v1099 = vadd.f32 0.0, %v1098
        %1100 = vmatprep.mubr.f32.mxu0 0.0
        %1101 = vmatmul.mubr.f32.gmra.mrb[0].mxu0 %v1008
        %v1102 = vpop.f32.mrb[0].mxu0
        %v1103 = vadd.f32 0.0, %v1102
        %v1104 = vpop.f32.mrb[0].mxu0
        %v1105 = vadd.f32 0.0, %v1104
        %1106 = vmatprep.mubr.f32.mxu0 0.0
        %1107 = vmatmul.mubr.f32.gmra.mrb[0].mxu0 %v1009
        %v1108 = vpop.f32.mrb[0].mxu0
        %v1109 = vadd.f32 0.0, %v1108
        %v1110 = vpop.f32.mrb[0].mxu0
        %v1111 = vadd.f32 0.0, %v1110
        %1112 = vmatprep.mubr.f32.mxu0 0.0
        %1113 = vmatmul.mubr.f32.gmra.mrb[0].mxu0 %v1010
        %v1114 = vpop.f32.mrb[0].mxu0
        %v1115 = vadd.f32 0.0, %v1114
        %v1116 = vpop.f32.mrb[0].mxu0
        %v1117 = vadd.f32 0.0, %v1116
        %1118 = vmatprep.mubr.f32.mxu0 0.0
        %1119 = vmatmul.mubr.f32.gmra.mrb[0].mxu0 %v1011
        %v1120 = vpop.f32.mrb[0].mxu0
        %v1121 = vadd.f32 0.0, %v1120
        %v1122 = vpop.f32.mrb[0].mxu0
        %v1123 = vadd.f32 0.0, %v1122
        %1124 = vdwg.mxu0
        %v1125 = vsub.f32 %v1079, %v305
        %v1126 = vsub.f32 %v1081, %v306
        %v1127 = vsub.f32 %v1085, %v307
        %v1128 = vsub.f32 %v1087, %v308
        %v1129 = vsub.f32 %v1091, %v309
        %v1130 = vsub.f32 %v1093, %v310
        %v1131 = vsub.f32 %v1097, %v311
        %v1132 = vsub.f32 %v1099, %v312
        %v1133 = vsub.f32 %v1103, %v313
        %v1134 = vsub.f32 %v1105, %v314
        %v1135 = vsub.f32 %v1109, %v315
        %v1136 = vsub.f32 %v1111, %v316
        %v1137 = vsub.f32 %v1115, %v317
        %v1138 = vsub.f32 %v1117, %v318
        %v1139 = vsub.f32 %v1121, %v319
        %v1140 = vsub.f32 %v1123, %v320
        %v1141 = vmul.f32 %v1125, %v1125
        %v1142 = vmul.f32 %v1126, %v1126
        %v1143 = vmul.f32 %v1127, %v1127
        %v1144 = vmul.f32 %v1128, %v1128
        %v1145 = vmul.f32 %v1129, %v1129
        %v1146 = vmul.f32 %v1130, %v1130
        %v1147 = vmul.f32 %v1131, %v1131
        %v1148 = vmul.f32 %v1132, %v1132
        %v1149 = vmul.f32 %v1133, %v1133
        %v1150 = vmul.f32 %v1134, %v1134
        %v1151 = vmul.f32 %v1135, %v1135
        %v1152 = vmul.f32 %v1136, %v1136
        %v1153 = vmul.f32 %v1137, %v1137
        %v1154 = vmul.f32 %v1138, %v1138
        %v1155 = vmul.f32 %v1139, %v1139
        %v1156 = vmul.f32 %v1140, %v1140
        %v1157 = vadd.f32 %v1141, %v1143
        %v1158 = vadd.f32 %v1157, %v1145
        %v1159 = vadd.f32 %v1158, %v1147
        %v1160 = vadd.f32 %v1159, %v1149
        %v1161 = vadd.f32 %v1160, %v1151
        %v1162 = vadd.f32 %v1161, %v1153
        %v1163 = vadd.f32 %v1162, %v1155
        %v1164 = vrot.slane %v1163, 4
        %v1165 = vadd.f32 %v1163, %v1164
        %v1166 = vrot.slane %v1165, 2
        %v1167 = vadd.f32 %v1165, %v1166
        %v1168 = vrot.slane %v1167, 1
        %v1169 = vadd.f32 %v1167, %v1168
        %v1170 = vadd.f32 %v1142, %v1144
        %v1171 = vadd.f32 %v1170, %v1146
        %v1172 = vadd.f32 %v1171, %v1148
        %v1173 = vadd.f32 %v1172, %v1150
        %v1174 = vadd.f32 %v1173, %v1152
        %v1175 = vadd.f32 %v1174, %v1154
        %v1176 = vadd.f32 %v1175, %v1156
        %v1177 = vrot.slane %v1176, 4
        %v1178 = vadd.f32 %v1176, %v1177
        %v1179 = vrot.slane %v1178, 2
        %v1180 = vadd.f32 %v1178, %v1179
        %v1181 = vrot.slane %v1180, 1
        %v1182 = vadd.f32 %v1180, %v1181
        %1183 = vst [vmem:[%s277] sm:$0xff] %v1079
        %1184 = vst [vmem:[%s277 + $0x8] sm:$0xff] %v1081
        %1185 = vst [vmem:[%s277 + $0x10] sm:$0xff] %v1085
        %1186 = vst [vmem:[%s277 + $0x18] sm:$0xff] %v1087
        %1187 = vst [vmem:[%s277 + $0x20] sm:$0xff] %v1091
        %1188 = vst [vmem:[%s277 + $0x28] sm:$0xff] %v1093
        %1189 = vst [vmem:[%s277 + $0x30] sm:$0xff] %v1097
        %1190 = vst [vmem:[%s277 + $0x38] sm:$0xff] %v1099
        %1191 = vst [vmem:[%s277 + $0x40] sm:$0xff] %v1103
        %1192 = vst [vmem:[%s277 + $0x48] sm:$0xff] %v1105
        %1193 = vst [vmem:[%s277 + $0x50] sm:$0xff] %v1109
        %1194 = vst [vmem:[%s277 + $0x58] sm:$0xff] %v1111
        %1195 = vst [vmem:[%s277 + $0x60] sm:$0xff] %v1115
        %1196 = vst [vmem:[%s277 + $0x68] sm:$0xff] %v1117
        %1197 = vst [vmem:[%s277 + $0x70] sm:$0xff] %v1121
        %1198 = vst [vmem:[%s277 + $0x78] sm:$0xff] %v1123
        %v1199 = vcombine.low %v868, %v907
        %v1201 = vunpack.c.l.s4 1966171168
        %v1202 = vunpack.c.0.s8 %v1201
        %v1203 = vlaneseq
        %v1204 = vshrl.u32 %v1203, 7
        %v1205 = vsub.s32 %v1202, %v1204
        %v1206 = vrot.slane %v1199, %v1205
        %v1208 = vunpack.c.l.s4 1966171168
        %v1209 = vunpack.c.0.s8 %v1208
        %v1210 = vlaneseq
        %v1211 = vshrl.u32 %v1210, 7
        %v1212 = vsub.s32 %v1209, %v1211
        %v1213 = vrot.slane %v1206, %v1212
        %v1214 = vlaneseq
        %vm1215 = vcmp.ge.s32.totalorder %v1214, 0
        %vm1216 = vcmp.lt.s32.totalorder %v1214, 256
        %vm1217 = vmand %vm1215, %vm1216
        %1218 = vst.msk [vmem:[%s284] sm:$0x3] %vm1217, %v1213
        %v1221 = vcombine.low %v1169, %v1182
        %v1223 = vunpack.c.l.s4 1966171168
        %v1224 = vunpack.c.0.s8 %v1223
        %v1225 = vlaneseq
        %v1226 = vshrl.u32 %v1225, 7
        %v1227 = vsub.s32 %v1224, %v1226
        %v1228 = vrot.slane %v1221, %v1227
        %v1230 = vunpack.c.l.s4 1966171168
        %v1231 = vunpack.c.0.s8 %v1230
        %v1232 = vlaneseq
        %v1233 = vshrl.u32 %v1232, 7
        %v1234 = vsub.s32 %v1231, %v1233
        %v1235 = vrot.slane %v1228, %v1234
        %1237 = vst.msk [vmem:[%s291] sm:$0x3] %vm1217, %v1235
        %s1238 = sand.u32 %s137, 1
        %s1239 = scalar_lea.sflag [#allocation3], %s1238
        %s1240 = sand.u32 %s137, 1
        %s1241 = smul.addr %s1240, 128
        %s1242 = scalar_lea.vmem [#allocation2], %s1241
        %s1243 = sand.u32 %s24, 1
        %s1244 = scalar_lea.sflag [#allocation5], %s1243
        %s1245 = sand.u32 %s165, 1
        %s1246 = smul.addr %s1245, 2
        %s1247 = scalar_lea.vmem [#allocation4], %s1246
        %s1248 = sand.u32 %s24, 1
        %s1249 = scalar_lea.sflag [#allocation5], %s1248
        %s1250 = sand.u32 %s193, 1
        %s1251 = smul.addr %s1250, 2
        %s1252 = scalar_lea.vmem [#allocation6], %s1251
        // Predicated region
        $region37: #{tpu_custom_call.1} parent=35 // pred_check
          %p1253 = pneg %p147
        $region38: #{tpu_custom_call.1} parent=35 // pred_check_branch
          %1255 = sbr.rel (%p1253) target = $region40
        $region39: #{tpu_custom_call.1} parent=35 // pred_region
          %s1256 = smul.u32 2, %s29
          %s1258 = ssub.s32 2048, 2048
          %1259 = vsyncadd %s1239, %s1258
          %s1260 = smul.addr %s28, 16
          %s1261 = sadd.s32 %s1256, %s1260
          %s1262 = smul.addr %s1261, 128
          %s1263 = scalar_lea.hbm %s4, %s1262
          %s1264 = sshll.u32 %s1242, 4
          %s1265 = int_to_ptr.vmem [resolvable:$true] %s1264
          %1270 = dma.vmem_to_hbm [thread:$0]  %s1265, 2048, %s1263, %s1239, 256, 256, 16
        $region40: #{tpu_custom_call.1} parent=35 // pred_fallthru
          _
        // Predicated region
        $region41: #{tpu_custom_call.1} parent=35 // pred_check
          %p1271 = pneg %p175
        $region42: #{tpu_custom_call.1} parent=35 // pred_check_branch
          %1273 = sbr.rel (%p1271) target = $region44
        $region43: #{tpu_custom_call.1} parent=35 // pred_region
          %s1274 = smul.u32 2, %s29
          %s1276 = ssub.s32 32, 32
          %1277 = vsyncadd %s1244, %s1276
          %s1278 = smul.addr %s28, 2
          %s1279 = sadd.s32 %s1274, %s1278
          %s1280 = smul.addr %s1279, 16
          %s1281 = scalar_lea.hbm %s5, %s1280
          %s1283 = sshll.u32 %s1247, 4
          %s1284 = int_to_ptr.vmem [resolvable:$true] %s1283
          %1286 = dma.vmem_to_hbm [thread:$0]  %s1284, 32, %s1281, %s1244
        $region44: #{tpu_custom_call.1} parent=35 // pred_fallthru
          _
        // Predicated region
        $region45: #{tpu_custom_call.1} parent=35 // pred_check
          %p1287 = pneg %p203
        $region46: #{tpu_custom_call.1} parent=35 // pred_check_branch
          %1289 = sbr.rel (%p1287) target = $region48
        $region47: #{tpu_custom_call.1} parent=35 // pred_region
          %s1290 = smul.u32 2, %s29
          %s1292 = ssub.s32 32, 32
          %1293 = vsyncadd %s1249, %s1292
          %s1294 = smul.addr %s28, 2
          %s1295 = sadd.s32 %s1290, %s1294
          %s1296 = smul.addr %s1295, 16
          %s1297 = scalar_lea.hbm %s6, %s1296
          %s1299 = sshll.u32 %s1252, 4
          %s1300 = int_to_ptr.vmem [resolvable:$true] %s1299
          %1302 = dma.vmem_to_hbm [thread:$0]  %s1300, 32, %s1297, %s1249
        $region48: #{tpu_custom_call.1} parent=35 // pred_fallthru
          _
      $region36: #{tpu_custom_call.1} parent=5 // pred_fallthru
        _
      %p1303 = scmp.le.s32.totalorder 2, %s19
      // Predicated region
      $region49: #{tpu_custom_call.1} parent=5 // pred_check
        %p1304 = pneg %p1303
      $region50: #{tpu_custom_call.1} parent=5 // pred_check_branch
        %1306 = sbr.rel (%p1304) target = $region52
      $region51: #{tpu_custom_call.1} parent=5 // pred_region
        %s1307 = ssub.s32 %s19, 2
        // Predicated region
        $region53: #{tpu_custom_call.1} parent=51 // pred_check
          %p1308 = pneg %p153
        $region54: #{tpu_custom_call.1} parent=51 // pred_check_branch
          %1310 = sbr.rel (%p1308) target = $region56
        $region55: #{tpu_custom_call.1} parent=51 // pred_region
          %s1311 = sand.u32 %s138, 1
          %s1312 = scalar_lea.sflag [#allocation3], %s1311
          %s1313 = sand.u32 %s138, 1
          %s1314 = smul.addr %s1313, 128
          %s1315 = scalar_lea.vmem [#allocation2], %s1314
          %1316 = dma.done %s1312, 2048
        $region56: #{tpu_custom_call.1} parent=51 // pred_fallthru
          _
        // Predicated region
        $region57: #{tpu_custom_call.1} parent=51 // pred_check
          %p1317 = pneg %p181
        $region58: #{tpu_custom_call.1} parent=51 // pred_check_branch
          %1319 = sbr.rel (%p1317) target = $region60
        $region59: #{tpu_custom_call.1} parent=51 // pred_region
          %s1320 = sand.u32 %s25, 1
          %s1321 = scalar_lea.sflag [#allocation5], %s1320
          %s1322 = sand.u32 %s166, 1
          %s1323 = smul.addr %s1322, 2
          %s1324 = scalar_lea.vmem [#allocation4], %s1323
          %1325 = dma.done %s1321, 32
        $region60: #{tpu_custom_call.1} parent=51 // pred_fallthru
          _
        // Predicated region
        $region61: #{tpu_custom_call.1} parent=51 // pred_check
          %p1326 = pneg %p209
        $region62: #{tpu_custom_call.1} parent=51 // pred_check_branch
          %1328 = sbr.rel (%p1326) target = $region64
        $region63: #{tpu_custom_call.1} parent=51 // pred_region
          %s1329 = sand.u32 %s25, 1
          %s1330 = scalar_lea.sflag [#allocation5], %s1329
          %s1331 = sand.u32 %s194, 1
          %s1332 = smul.addr %s1331, 2
          %s1333 = scalar_lea.vmem [#allocation6], %s1332
          %1334 = dma.done %s1330, 32
        $region64: #{tpu_custom_call.1} parent=51 // pred_fallthru
          _
      $region52: #{tpu_custom_call.1} parent=5 // pred_fallthru
        _
    $region6: #{tpu_custom_call.1} parent=1 // loop_footer
      %s23 = sadd.s32 1, %s19
    $region7: #{tpu_custom_call.1} parent=1 // loop_footer_branch
      %18 = sbr.rel target = $region3
    $region8: #{tpu_custom_call.1} parent=1 // loop_exit
      _
    %1335 = vsyncpa [#allocation3], 1
    %s1336 = scalar_lea.sflag [#allocation3], 1
    %1337 = vsyncpa %s1336, 1
    %1338 = vsyncpa [#allocation5], 1
    %s1339 = scalar_lea.sflag [#allocation5], 1
    %1340 = vsyncpa %s1339, 1

</llo_original>
